<compile_context>
chip_gen: v5e
topology: v5e:2x2
jax: 0.10.0
libtpu: 0.0.40
codegen_flags: <defaults>
</compile_context>

<pallas_src>
import math
from functools import partial

import jax
import jax.numpy as jnp
import numpy as np
from jax import lax
from jax.experimental import pallas as pl
from jax.experimental.pallas import tpu as pltpu


_DEFAULT_TILE_BYTES = 4 << 20   # per input tile; Pallas double-buffers it
_FAST_PATH_BYTES = 1 << 20      # below this, fused XLA reduce beats launch cost
_LANE = 128


def _sublane_pack(itemsize):
    # Native sublane packing per dtype width: f32 -> 8, bf16 -> 16, int8/fp8 -> 32.
    return {4: 8, 2: 16, 1: 32}.get(int(itemsize), 8)


def _round_up(a, b):
    return (a + b - 1) // b * b


def _pick_tiles(R, L, itemsize, tile_bytes):
    """Pick (tile_r, tile_l) under the *padded* VMEM budget, (8,128)-legal."""
    pack = _sublane_pack(itemsize)
    # Lane (reduction) axis: take all of L when even `pack` sublanes of the
    # 128-lane-padded row fit the budget; otherwise a 128-aligned chunk.
    if _round_up(L, _LANE) * pack * itemsize <= tile_bytes or L <= _LANE:
        tile_l = L
    else:
        tile_l = max(_LANE, (tile_bytes // (pack * itemsize)) // _LANE * _LANE)
        tile_l = min(tile_l, (L // _LANE) * _LANE)
    tile_l_pad = _round_up(tile_l, _LANE)

    # Sublane (row) axis: fill what remains of the padded budget.
    tile_r = max(1, tile_bytes // (tile_l_pad * itemsize))
    tile_r = min(R, tile_r)
    if tile_r < R:
        tile_r = max(pack, tile_r // pack * pack)   # dtype-aware sublane rounding

    # Keep >= 4 row blocks when there are enough rows so both v7x TensorCores
    # get work under "parallel" semantics (no effect on single-TC v5e/v6e).
    min_row_blocks = 4
    if R >= min_row_blocks * pack:
        cap = max(pack, (R // min_row_blocks) // pack * pack)
        tile_r = min(tile_r, cap)
    return tile_r, tile_l


def _mean_rows_kernel(x_ref, o_ref, *, inv_l):
    """Whole reduction axis in one tile: one cross-lane reduce per row block."""
    x = x_ref[...].astype(jnp.float32)
    s = jnp.sum(x, axis=-1, keepdims=True)
    o_ref[...] = (s * jnp.float32(inv_l)).astype(o_ref.dtype)


def _mean_rows_chunked_kernel(x_ref, o_ref, acc_ref, *, L, tile_l, grid_k):
    """Streaming reduce: 128-lane groups -> (tile_r, 128) f32 accumulator."""
    k = pl.program_id(1)
    n_groups = tile_l // _LANE
    last_off = (grid_k - 1) * tile_l
    rem = L - last_off                 # static: columns present in last chunk

    @pl.when(k == 0)
    def _init():
        acc_ref[...] = jnp.zeros_like(acc_ref)

    def _accum_full():
        s = x_ref[:, pl.ds(0, _LANE)].astype(jnp.float32)
        for g in range(1, n_groups):
            s = s + x_ref[:, pl.ds(g * _LANE, _LANE)].astype(jnp.float32)
        acc_ref[...] += s

    if rem == tile_l:
        # L divides evenly: every chunk (including the last) is full, no mask.
        _accum_full()
    else:
        @pl.when(k < grid_k - 1)
        def _full():
            _accum_full()

        @pl.when(k == grid_k - 1)
        def _tail():
            # Only the last chunk reads out-of-bounds columns; mask them here.
            n_full = rem // _LANE
            part = rem - n_full * _LANE
            s = jnp.zeros(acc_ref.shape, jnp.float32)
            for g in range(n_full):
                s = s + x_ref[:, pl.ds(g * _LANE, _LANE)].astype(jnp.float32)
            if part:
                xg = x_ref[:, pl.ds(n_full * _LANE, _LANE)].astype(jnp.float32)
                col = lax.broadcasted_iota(jnp.int32, xg.shape, 1)
                s = s + jnp.where(col < part, xg, jnp.float32(0.0))
            acc_ref[...] += s

    @pl.when(k == grid_k - 1)
    def _finish():
        total = jnp.sum(acc_ref[...], axis=-1, keepdims=True)   # one XLU reduce
        o_ref[...] = (total * jnp.float32(1.0 / L)).astype(o_ref.dtype)


def einops_reduce_mean(x, pattern="b c h w -> b c", *,
                       tile_bytes=_DEFAULT_TILE_BYTES, force_pallas=False):
    """Pallas implementation of einops.reduce(x, 'b c h w -> b c', 'mean')."""
    if pattern != "b c h w -> b c":
        # TODO(synk): only the "b c h w -> b c" pattern used by the diff_ae
        # swin model is implemented; other einops patterns need their own
        # reshape/tiling.
        raise NotImplementedError(f"unsupported pattern: {pattern!r}")

    B, C, H, W = x.shape
    R, L = B * C, H * W
    itemsize = x.dtype.itemsize

    if not force_pallas and R * L * itemsize < _FAST_PATH_BYTES:
        # Single-tile inputs: pallas_call fixed overhead dominates; XLA's
        # fused reduce is faster.
        return jnp.mean(x, axis=(2, 3)).astype(x.dtype)

    x2 = x.reshape(R, L)               # free view: (h, w) are contiguous
    tile_r, tile_l = _pick_tiles(R, L, itemsize, tile_bytes)
    grid_r = pl.cdiv(R, tile_r)
    grid_k = pl.cdiv(L, tile_l)

    cost = pl.CostEstimate(flops=R * L, transcendentals=0,
                           bytes_accessed=R * L * itemsize + R * itemsize)
    in_tile_bytes = _round_up(tile_r, 8) * _round_up(tile_l, _LANE) * itemsize
    vmem_limit = int(min(64 << 20, max(16 << 20, 4 * in_tile_bytes + (4 << 20))))

    if grid_k == 1:
        out = pl.pallas_call(
            partial(_mean_rows_kernel, inv_l=1.0 / L),
            out_shape=jax.ShapeDtypeStruct((R, 1), x.dtype),
            grid=(grid_r,),
            in_specs=[pl.BlockSpec((tile_r, L), lambda i: (i, 0))],
            out_specs=pl.BlockSpec((tile_r, 1), lambda i: (i, 0)),
            compiler_params=pltpu.CompilerParams(
                dimension_semantics=("parallel",),
                vmem_limit_bytes=vmem_limit),
            cost_estimate=cost,
        )(x2)
    else:
        out = pl.pallas_call(
            partial(_mean_rows_chunked_kernel, L=L, tile_l=tile_l, grid_k=grid_k),
            out_shape=jax.ShapeDtypeStruct((R, 1), x.dtype),
            grid=(grid_r, grid_k),
            in_specs=[pl.BlockSpec((tile_r, tile_l), lambda i, k: (i, k))],
            out_specs=pl.BlockSpec((tile_r, 1), lambda i, k: (i, 0)),
            scratch_shapes=[pltpu.VMEM((tile_r, _LANE), jnp.float32)],
            compiler_params=pltpu.CompilerParams(
                dimension_semantics=("parallel", "arbitrary"),
                vmem_limit_bytes=vmem_limit),
            cost_estimate=cost,
        )(x2)
    return out.reshape(B, C)


if __name__ == "__main__":
    key = jax.random.PRNGKey(0)

    # Small NCHW input consistent with the module's typical use.
    x = jax.random.normal(key, (2, 4, 16, 16), dtype=jnp.float32)
    ref = jnp.mean(x, axis=(2, 3))

    # 1) Pallas path (single-chunk kernel) forced on the small test shape.
    out = jax.block_until_ready(einops_reduce_mean(x, force_pallas=True))
    assert out.shape == (2, 4), out.shape
    assert out.dtype == x.dtype, out.dtype
    np.testing.assert_allclose(np.asarray(out), np.asarray(ref),
                               rtol=1e-5, atol=1e-5)

    # 2) Default path (tiny-input XLA fast path) — same semantics.
    out_fast = jax.block_until_ready(einops_reduce_mean(x))
    np.testing.assert_allclose(np.asarray(out_fast), np.asarray(ref),
                               rtol=1e-5, atol=1e-5)

    # 3) Chunked-reduction kernel exercised with a deliberately tiny tile
    #    budget and a non-128-multiple spatial size (tests the masked tail).
    key2 = jax.random.PRNGKey(0)
    y = jax.random.normal(key2, (2, 4, 20, 20), dtype=jnp.float32)
    out_chunked = jax.block_until_ready(
        einops_reduce_mean(y, force_pallas=True, tile_bytes=8192))
    ref_y = jnp.mean(y, axis=(2, 3))
    np.testing.assert_allclose(np.asarray(out_chunked), np.asarray(ref_y),
                               rtol=1e-5, atol=1e-5)

    print("KERNEL_OK")
</pallas_src>

<mosaic_0001>
module attributes {stable_mosaic.version = 11 : i64} {
  func.func @_mean_rows_kernel(%arg0: i32, %arg1: memref<8x256xf32, #tpu.memory_space<vmem>>, %arg2: memref<8x1xf32, #tpu.memory_space<vmem>>) attributes {dimension_semantics = [#tpu.dimension_semantics<parallel>], iteration_bounds = array<i64: 1>, scalar_prefetch = 0 : i64, scratch_operands = 0 : i64, tpu.core_type = #tpu.core_type<tc>, window_params = [{transform_indices = @transform_0, window_bounds = array<i64: 8, 256>}, {transform_indices = @transform_1, window_bounds = array<i64: 8, 1>}]} {
    %c0 = arith.constant 0 : index
    %c0_0 = arith.constant 0 : index
    %0 = vector.load %arg1[%c0, %c0_0] : memref<8x256xf32, #tpu.memory_space<vmem>>, vector<8x256xf32>
    %cst = arith.constant dense<0.000000e+00> : vector<8xf32>
    %1 = vector.multi_reduction <add>, %0, %cst [1] : vector<8x256xf32> to vector<8xf32>
    %2 = vector.shape_cast %1 : vector<8xf32> to vector<8x1xf32>
    %cst_1 = arith.constant 3.906250e-03 : f32
    %3 = vector.broadcast %cst_1 : f32 to vector<8x1xf32>
    %4 = arith.mulf %2, %3 : vector<8x1xf32>
    %c0_2 = arith.constant 0 : index
    %c0_3 = arith.constant 0 : index
    %5 = vector.load %arg2[%c0_2, %c0_3] : memref<8x1xf32, #tpu.memory_space<vmem>>, vector<8x1xf32>
    tpu.vector_store %arg2[%c0_2, %c0_3], %4 {strides = array<i32>} : memref<8x1xf32, #tpu.memory_space<vmem>>, vector<8x1xf32>,
    return
  }
  func.func @transform_0(%arg0: i32) -> (i32, i32) {
    %c0_i32 = arith.constant 0 : i32
    %c0_i32_0 = arith.constant 0 : i32
    return %arg0, %c0_i32 : i32, i32
  }
  func.func @transform_1(%arg0: i32) -> (i32, i32) {
    %c0_i32 = arith.constant 0 : i32
    %c0_i32_0 = arith.constant 0 : i32
    return %arg0, %c0_i32 : i32, i32
  }
}

</mosaic_0001>

<llo_original>
// kernel: tpu_custom_call.1
$region0: #{tpu_custom_call.1}
  #allocation0 [shape = 'u32[]', space=smem, size = 0x4, offset = 0x4, fixed_abs, tag = 'smem constant byte address 0x4 - core index']
  #allocation1 [shape = 'u32[72,128]{1,0:T(1,128)}', space=vmem, size = 0x9000, scoped, tag = 'internal scratch']
  %s0 = inlined_call_operand.hbm [shape: f32[8,256], index: 0, kind: input, shape index: {}]
  %s1 = inlined_call_operand.vmem [shape: f32[8,1], index: 1, kind: output, shape index: {}]
  %s2 = sld [smem:[#allocation0]]
  $region18: #{tpu_custom_call.1} parent=0
    _
  %s4 = ssub.s32 1, %s2
  %s5 = scalar_select 0, %s4, %s2
  $region1: #{tpu_custom_call.1} parent=0
    #allocation2 [shape = 'u8[8192]{0}', space=vmem, size = 0x2000, scoped, tag = 'input window, operand 0, single buffered']
    #allocation3 [shape = 's32[1]{0}', space=sflag, size = 0x4, scoped, tag = 'scoped memory for tpu_custom_call.1']
    %6 = vsyncpa [#allocation3], 0
    // Predicated region
    $region2: #{tpu_custom_call.1} parent=1 // pred_check
      _
    $region3: #{tpu_custom_call.1} parent=1 // pred_check_branch
      %8 = sbr.rel (0) target = $region5
    $region4: #{tpu_custom_call.1} parent=1 // pred_region
      %10 = vsyncadd [#allocation3], 0
      %s12 = sshll.u32 %s0, 4
      %s13 = int_to_ptr.hbm [resolvable:$true] %s12
      %s14 = sshll.u32 [#allocation2], 4
      %s15 = int_to_ptr.vmem [resolvable:$true] %s14
      %17 = dma.hbm_to_vmem [thread:$0]  %s13, 256, %s15, [#allocation3]
    $region5: #{tpu_custom_call.1} parent=1 // pred_fallthru
      _
    // Predicated region
    $region6: #{tpu_custom_call.1} parent=1 // pred_check
      _
    $region7: #{tpu_custom_call.1} parent=1 // pred_check_branch
      %19 = sbr.rel (0) target = $region9
    $region8: #{tpu_custom_call.1} parent=1 // pred_region
      %21 = dma.done [#allocation3], 256
    $region9: #{tpu_custom_call.1} parent=1 // pred_fallthru
      _
    %v22 = vld [vmem:[#allocation2] sm:$0xff]
    %v23 = vld [vmem:[#allocation2 + $0x8] sm:$0xff]
    %v24 = vadd.f32 %v22, %v23
    %25 = vadd.xlane.f32.xlu0 %v24
    %v26 = vpop.xlane.xlu0 %25
    %v27 = vmul.f32 %v26, 0.00390625
    %vm28 = vcmask 7168
    %29 = vst.msk [vmem:[%s1] sm:$0xff] %vm28, %v27
    // Predicated region
    $region10: #{tpu_custom_call.1} parent=1 // pred_check
      _
    $region11: #{tpu_custom_call.1} parent=1 // pred_check_branch
      %31 = sbr.rel (0) target = $region13
    $region12: #{tpu_custom_call.1} parent=1 // pred_region
      _
    $region13: #{tpu_custom_call.1} parent=1 // pred_fallthru
      _
    // Predicated region
    $region14: #{tpu_custom_call.1} parent=1 // pred_check
      _
    $region15: #{tpu_custom_call.1} parent=1 // pred_check_branch
      %33 = sbr.rel (0) target = $region17
    $region16: #{tpu_custom_call.1} parent=1 // pred_region
      _
    $region17: #{tpu_custom_call.1} parent=1 // pred_fallthru
      _
    %34 = vsyncpa [#allocation3], 1

</llo_original>
